<compile_context>
chip_gen: v5e
topology: v5e:2x2
jax: 0.10.0
libtpu: 0.0.40
codegen_flags: <defaults>
</compile_context>

<pallas_src>
import functools

import jax
import jax.numpy as jnp
from jax.experimental import pallas as pl
from jax.experimental.pallas import tpu as pltpu

_TARGET_BLOCK_BYTES = 4 << 20   # per-input block (Pallas double-buffers it)


def _chroma_loss_kernel(out_ref, tgt_ref, psum_ref, *, h_total, tile_h, ragged):
    # out_ref / tgt_ref: (1, 3, tile_h, W) blocks of the (N, 3, H, W) inputs.
    # psum_ref:          (1, 1, 1, W) per-(image, h-tile) partial row-sums.
    def diff(c):
        return (out_ref[0, c].astype(jnp.float32)
                - tgt_ref[0, c].astype(jnp.float32))          # (tile_h, W)

    dr, dg, db = diff(0), diff(1), diff(2)
    dy = 0.299 * dr + 0.587 * dg + 0.114 * db                 # Y diff
    # +0.5 offsets cancel in the difference: per-pixel |dCb| + |dCr|
    v = 0.564 * jnp.abs(db - dy) + 0.713 * jnp.abs(dr - dy)

    if ragged:
        # Only the last H-tile ever sees rows past H (undefined block data);
        # only that tile pays for the iota/compare/select.
        t = pl.program_id(1)
        last = pl.num_programs(1) - 1

        @pl.when(t != last)
        def _():
            psum_ref[0, 0] = jnp.sum(v, axis=0, keepdims=True)

        @pl.when(t == last)
        def _():
            valid = h_total - t * tile_h
            rid = jax.lax.broadcasted_iota(jnp.int32, v.shape, 0)
            vm = jnp.where(rid < valid, v, 0.0)
            psum_ref[0, 0] = jnp.sum(vm, axis=0, keepdims=True)
    else:
        psum_ref[0, 0] = jnp.sum(v, axis=0, keepdims=True)


def _pick_tile_h(N, H, W):
    """H-tile size: ~4 MiB per input block, rows a multiple of 8 (or == H)."""
    w_pad = pl.cdiv(W, 128) * 128             # lanes occupied per row in VMEM
    row_bytes = 3 * w_pad * 4                 # conservative: f32 VMEM rows
    cap = max(8, (_TARGET_BLOCK_BYTES // row_bytes) // 8 * 8)
    tile_h = H if H <= cap else cap
    num_tiles = pl.cdiv(H, tile_h)
    # v7x has 2 TensorCores: make sure the all-parallel grid has >= 2 steps.
    if N * num_tiles < 2 and H > 8:
        tile_h = max(8, ((H + 1) // 2 + 7) // 8 * 8)
        num_tiles = pl.cdiv(H, tile_h)
    return tile_h, num_tiles


def chroma_loss(output, target):
    """F.l1_loss(rgb_to_ycbcr(output)[:, 1:], rgb_to_ycbcr(target)[:, 1:])."""
    assert output.shape == target.shape, "output/target shape mismatch"
    N, C, H, W = output.shape
    assert C == 3, "ChromaLoss expects RGB inputs (C == 3)"

    tile_h, num_tiles = _pick_tile_h(N, H, W)
    ragged = (H % tile_h) != 0

    kernel = functools.partial(
        _chroma_loss_kernel, h_total=H, tile_h=tile_h, ragged=ragged)

    itemsize = jnp.dtype(output.dtype).itemsize
    cost = pl.CostEstimate(
        flops=16 * N * H * W,
        transcendentals=0,
        bytes_accessed=2 * 3 * N * H * W * itemsize + N * num_tiles * W * 4,
    )

    psums = pl.pallas_call(
        kernel,
        out_shape=jax.ShapeDtypeStruct((N, num_tiles, 1, W), jnp.float32),
        grid=(N, num_tiles),
        in_specs=[
            pl.BlockSpec((1, 3, tile_h, W), lambda n, t: (n, 0, t, 0)),
            pl.BlockSpec((1, 3, tile_h, W), lambda n, t: (n, 0, t, 0)),
        ],
        out_specs=pl.BlockSpec((1, 1, 1, W), lambda n, t: (n, t, 0, 0)),
        compiler_params=pltpu.CompilerParams(
            dimension_semantics=("parallel", "parallel"),
            vmem_limit_bytes=40 << 20,
        ),
        cost_estimate=cost,
    )(output, target)

    # Mean over the (N, 2, H, W) chroma tensor (F.l1_loss default reduction).
    return jnp.sum(psums) / jnp.float32(N * 2 * H * W)


def _chroma_loss_ref(output, target):
    def to_ycbcr(x):
        r, g, b = x[:, 0], x[:, 1], x[:, 2]
        y = 0.299 * r + 0.587 * g + 0.114 * b
        cb = (b - y) * 0.564 + 0.5
        cr = (r - y) * 0.713 + 0.5
        return jnp.stack([y, cb, cr], axis=1)

    oy = to_ycbcr(output)[:, 1:]
    ty = to_ycbcr(target)[:, 1:]
    return jnp.mean(jnp.abs(oy - ty))


if __name__ == "__main__":
    key = jax.random.PRNGKey(0)
    k1, k2 = jax.random.split(key)
    N, C, H, W = 2, 3, 16, 16
    output = jax.random.uniform(k1, (N, C, H, W), dtype=jnp.float32)
    target = jax.random.uniform(k2, (N, C, H, W), dtype=jnp.float32)

    loss = jax.block_until_ready(chroma_loss(output, target))
    ref = jax.block_until_ready(_chroma_loss_ref(output, target))
    assert jnp.allclose(loss, ref, atol=1e-5, rtol=1e-5), (loss, ref)

    print("KERNEL_OK")
</pallas_src>

<mosaic_0001>
module attributes {stable_mosaic.version = 11 : i64} {
  func.func @_chroma_loss_kernel(%arg0: i32, %arg1: i32, %arg2: memref<1x3x16x16xf32, #tpu.memory_space<vmem>>, %arg3: memref<1x3x16x16xf32, #tpu.memory_space<vmem>>, %arg4: memref<1x1x1x16xf32, #tpu.memory_space<vmem>>) attributes {dimension_semantics = [#tpu.dimension_semantics<parallel>, #tpu.dimension_semantics<parallel>], iteration_bounds = array<i64: 2, 1>, scalar_prefetch = 0 : i64, scratch_operands = 0 : i64, tpu.core_type = #tpu.core_type<tc>, window_params = [{transform_indices = @transform_0, window_bounds = array<i64: 1, 3, 16, 16>}, {transform_indices = @transform_1, window_bounds = array<i64: 1, 3, 16, 16>}, {transform_indices = @transform_2, window_bounds = array<i64: 1, 1, 1, 16>}]} {
    %c0 = arith.constant 0 : index
    %c0_0 = arith.constant 0 : index
    %c0_1 = arith.constant 0 : index
    %c0_2 = arith.constant 0 : index
    %0 = vector.load %arg2[%c0, %c0_0, %c0_1, %c0_2] : memref<1x3x16x16xf32, #tpu.memory_space<vmem>>, vector<1x1x16x16xf32>
    %1 = vector.shape_cast %0 : vector<1x1x16x16xf32> to vector<16x16xf32>
    %c0_3 = arith.constant 0 : index
    %c0_4 = arith.constant 0 : index
    %c0_5 = arith.constant 0 : index
    %c0_6 = arith.constant 0 : index
    %2 = vector.load %arg3[%c0_3, %c0_4, %c0_5, %c0_6] : memref<1x3x16x16xf32, #tpu.memory_space<vmem>>, vector<1x1x16x16xf32>
    %3 = vector.shape_cast %2 : vector<1x1x16x16xf32> to vector<16x16xf32>
    %4 = arith.subf %1, %3 : vector<16x16xf32>
    %c0_7 = arith.constant 0 : index
    %c1 = arith.constant 1 : index
    %c0_8 = arith.constant 0 : index
    %c0_9 = arith.constant 0 : index
    %5 = vector.load %arg2[%c0_7, %c1, %c0_8, %c0_9] : memref<1x3x16x16xf32, #tpu.memory_space<vmem>>, vector<1x1x16x16xf32>
    %6 = vector.shape_cast %5 : vector<1x1x16x16xf32> to vector<16x16xf32>
    %c0_10 = arith.constant 0 : index
    %c1_11 = arith.constant 1 : index
    %c0_12 = arith.constant 0 : index
    %c0_13 = arith.constant 0 : index
    %7 = vector.load %arg3[%c0_10, %c1_11, %c0_12, %c0_13] : memref<1x3x16x16xf32, #tpu.memory_space<vmem>>, vector<1x1x16x16xf32>
    %8 = vector.shape_cast %7 : vector<1x1x16x16xf32> to vector<16x16xf32>
    %9 = arith.subf %6, %8 : vector<16x16xf32>
    %c0_14 = arith.constant 0 : index
    %c2 = arith.constant 2 : index
    %c0_15 = arith.constant 0 : index
    %c0_16 = arith.constant 0 : index
    %10 = vector.load %arg2[%c0_14, %c2, %c0_15, %c0_16] : memref<1x3x16x16xf32, #tpu.memory_space<vmem>>, vector<1x1x16x16xf32>
    %11 = vector.shape_cast %10 : vector<1x1x16x16xf32> to vector<16x16xf32>
    %c0_17 = arith.constant 0 : index
    %c2_18 = arith.constant 2 : index
    %c0_19 = arith.constant 0 : index
    %c0_20 = arith.constant 0 : index
    %12 = vector.load %arg3[%c0_17, %c2_18, %c0_19, %c0_20] : memref<1x3x16x16xf32, #tpu.memory_space<vmem>>, vector<1x1x16x16xf32>
    %13 = vector.shape_cast %12 : vector<1x1x16x16xf32> to vector<16x16xf32>
    %14 = arith.subf %11, %13 : vector<16x16xf32>
    %cst = arith.constant 2.990000e-01 : f32
    %15 = vector.broadcast %cst : f32 to vector<16x16xf32>
    %16 = arith.mulf %15, %4 : vector<16x16xf32>
    %cst_21 = arith.constant 5.870000e-01 : f32
    %17 = vector.broadcast %cst_21 : f32 to vector<16x16xf32>
    %18 = arith.mulf %17, %9 : vector<16x16xf32>
    %19 = arith.addf %16, %18 : vector<16x16xf32>
    %cst_22 = arith.constant 1.140000e-01 : f32
    %20 = vector.broadcast %cst_22 : f32 to vector<16x16xf32>
    %21 = arith.mulf %20, %14 : vector<16x16xf32>
    %22 = arith.addf %19, %21 : vector<16x16xf32>
    %23 = arith.subf %14, %22 : vector<16x16xf32>
    %24 = math.absf %23 : vector<16x16xf32>
    %cst_23 = arith.constant 5.640000e-01 : f32
    %25 = vector.broadcast %cst_23 : f32 to vector<16x16xf32>
    %26 = arith.mulf %25, %24 : vector<16x16xf32>
    %27 = arith.subf %4, %22 : vector<16x16xf32>
    %28 = math.absf %27 : vector<16x16xf32>
    %cst_24 = arith.constant 0.712999999 : f32
    %29 = vector.broadcast %cst_24 : f32 to vector<16x16xf32>
    %30 = arith.mulf %29, %28 : vector<16x16xf32>
    %31 = arith.addf %26, %30 : vector<16x16xf32>
    %cst_25 = arith.constant dense<0.000000e+00> : vector<16xf32>
    %32 = vector.multi_reduction <add>, %31, %cst_25 [0] : vector<16x16xf32> to vector<16xf32>
    %33 = vector.shape_cast %32 : vector<16xf32> to vector<1x16xf32>
    %c0_26 = arith.constant 0 : index
    %c0_27 = arith.constant 0 : index
    %c0_28 = arith.constant 0 : index
    %c0_29 = arith.constant 0 : index
    %34 = vector.load %arg4[%c0_26, %c0_27, %c0_28, %c0_29] : memref<1x1x1x16xf32, #tpu.memory_space<vmem>>, vector<1x1x1x16xf32>
    %35 = vector.shape_cast %34 : vector<1x1x1x16xf32> to vector<1x16xf32>
    %36 = vector.shape_cast %33 : vector<1x16xf32> to vector<1x1x1x16xf32>
    tpu.vector_store %arg4[%c0_26, %c0_27, %c0_28, %c0_29], %36 {strides = array<i32>} : memref<1x1x1x16xf32, #tpu.memory_space<vmem>>, vector<1x1x1x16xf32>,
    return
  }
  func.func @transform_0(%arg0: i32, %arg1: i32) -> (i32, i32, i32, i32) {
    %c0_i32 = arith.constant 0 : i32
    %c0_i32_0 = arith.constant 0 : i32
    %c0_i32_1 = arith.constant 0 : i32
    return %arg0, %c0_i32, %arg1, %c0_i32_0 : i32, i32, i32, i32
  }
  func.func @transform_1(%arg0: i32, %arg1: i32) -> (i32, i32, i32, i32) {
    %c0_i32 = arith.constant 0 : i32
    %c0_i32_0 = arith.constant 0 : i32
    %c0_i32_1 = arith.constant 0 : i32
    return %arg0, %c0_i32, %arg1, %c0_i32_0 : i32, i32, i32, i32
  }
  func.func @transform_2(%arg0: i32, %arg1: i32) -> (i32, i32, i32, i32) {
    %c0_i32 = arith.constant 0 : i32
    %c0_i32_0 = arith.constant 0 : i32
    %c0_i32_1 = arith.constant 0 : i32
    return %arg0, %arg1, %c0_i32, %c0_i32_0 : i32, i32, i32, i32
  }
}

</mosaic_0001>

<llo_original>
// kernel: tpu_custom_call.1
$region0: #{tpu_custom_call.1}
  #allocation0 [shape = 'u32[]', space=smem, size = 0x4, offset = 0x4, fixed_abs, tag = 'smem constant byte address 0x4 - core index']
  #allocation1 [shape = 'u32[72,128]{1,0:T(1,128)}', space=vmem, size = 0x9000, scoped, tag = 'internal scratch']
  %s0 = inlined_call_operand.hbm [shape: f32[2,3,16,16], index: 0, kind: input, shape index: {}]
  %s1 = inlined_call_operand.hbm [shape: f32[2,3,16,16], index: 1, kind: input, shape index: {}]
  %s2 = inlined_call_operand.hbm [shape: f32[2,1,1,16], index: 2, kind: output, shape index: {}]
  %s3 = sld [smem:[#allocation0]]
  $region49: #{tpu_custom_call.1} parent=0
    _
  %s5 = ssub.s32 1, %s3
  %s6 = scalar_select 0, %s5, %s3
  $region1: #{tpu_custom_call.1} parent=0
    #allocation2 [shape = 'u8[49152]{0}', space=vmem, size = 0xc000, scoped, tag = 'input window, operand 0']
    #allocation3 [shape = 's32[2]{0}', space=sflag, size = 0x8, scoped, tag = 'scoped memory for tpu_custom_call.1']
    #allocation4 [shape = 's32[2]{0}', space=sflag, size = 0x8, scoped, tag = 'scoped memory for tpu_custom_call.1']
    #allocation5 [shape = 'u8[49152]{0}', space=vmem, size = 0xc000, scoped, tag = 'input window, operand 1']
    #allocation6 [shape = 's32[2]{0}', space=sflag, size = 0x8, scoped, tag = 'scoped memory for tpu_custom_call.1']
    #allocation7 [shape = 'u8[1024]{0}', space=vmem, size = 0x400, scoped, tag = 'output window, operand 0']
    %7 = vsyncpa [#allocation3], 0
    %s8 = scalar_lea.sflag [#allocation3], 1
    %9 = vsyncpa %s8, 0
    %10 = vsyncpa [#allocation6], 0
    %s11 = scalar_lea.sflag [#allocation6], 1
    %12 = vsyncpa %s11, 0
    %13 = vsyncpa [#allocation4], 0
    %s14 = scalar_lea.sflag [#allocation4], 1
    %15 = vsyncpa %s14, 0
    loop: start=0, step=1, limit=4
    $region2: #{tpu_custom_call.1} parent=1 // loop_pre_header
      _
    $region3: #{tpu_custom_call.1} parent=1 // loop_header
      %s17 = sphi 0, %s21
      %p18 = scmp.ge.s32.totalorder %s17, 4
      %s24 = sphi 0, %s36
      %s25 = sphi 0, %s32
      %s26 = sphi 0, %s24
      %s27 = sphi 0, %s25
      %s28 = sphi 0, %s26
      %s29 = sphi 0, %s27
      %s41 = sphi 0, %s43
      %s44 = sphi 0, %s41
      %s45 = sphi 0, %s44
      %s61 = sphi 0, %s45
      %s69 = sphi 0, %s71
      %s72 = sphi 0, %s69
      %s73 = sphi 0, %s72
      %s89 = sphi 0, %s73
      %s97 = sphi 0, %s99
      %s100 = sphi 0, %s97
      %s101 = sphi 0, %s100
      %s117 = sphi 0, %s101
    $region4: #{tpu_custom_call.1} parent=1 // loop_header_branch
      %20 = sbr.rel (%p18) target = $region8
    $region5: #{tpu_custom_call.1} parent=1 // loop_body
      %s22 = ssub.s32 %s17, 1
      %s23 = ssub.s32 %s17, 2
      %s30 = sadd.s32 1, %s25
      %p31 = scmp.ge.s32.totalorder %s30, 1
      %s32 = scalar_select %p31, 0, %s30
      %s33 = sadd.s32 1, %s24
      %s34 = scalar_select %p31, %s33, %s24
      %p35 = scmp.ge.s32.totalorder %s34, 2
      %s36 = scalar_select %p35, 0, %s34
      %s37 = ssub.s32 %s24, %s36
      %s38 = ssub.s32 %s25, %s32
      %s39 = sor.u32 %s37, %s38
      %p40 = scmp.eq.s32.totalorder %s39, 0
      %s42 = sadd.s32 %s41, 1
      %s43 = scalar_select %p40, %s41, %s42
      %p46 = pneg %p40
      %p47 = scmp.eq.s32.totalorder %s17, 1
      %p48 = por %p46, %p47
      %p49 = scmp.ne.s32.totalorder %s41, %s44
      %p50 = scmp.eq.s32.totalorder %s17, 0
      %p51 = por %p49, %p50
      %p52 = scmp.ne.s32.totalorder %s41, %s44
      %p53 = scmp.eq.s32.totalorder %s22, 1
      %p54 = por %p52, %p53
      %p55 = scmp.ne.s32.totalorder %s44, %s45
      %p56 = scmp.eq.s32.totalorder %s22, 0
      %p57 = por %p55, %p56
      %p58 = scmp.ne.s32.totalorder %s44, %s45
      %p59 = scmp.eq.s32.totalorder %s23, 1
      %p60 = por %p58, %p59
      %p62 = scmp.ne.s32.totalorder %s45, %s61
      %p63 = scmp.eq.s32.totalorder %s23, 0
      %p64 = por %p62, %p63
      %s65 = ssub.s32 %s24, %s36
      %s66 = ssub.s32 %s25, %s32
      %s67 = sor.u32 %s65, %s66
      %p68 = scmp.eq.s32.totalorder %s67, 0
      %s70 = sadd.s32 %s69, 1
      %s71 = scalar_select %p68, %s69, %s70
      %p74 = pneg %p68
      %p75 = scmp.eq.s32.totalorder %s17, 1
      %p76 = por %p74, %p75
      %p77 = scmp.ne.s32.totalorder %s69, %s72
      %p78 = scmp.eq.s32.totalorder %s17, 0
      %p79 = por %p77, %p78
      %p80 = scmp.ne.s32.totalorder %s69, %s72
      %p81 = scmp.eq.s32.totalorder %s22, 1
      %p82 = por %p80, %p81
      %p83 = scmp.ne.s32.totalorder %s72, %s73
      %p84 = scmp.eq.s32.totalorder %s22, 0
      %p85 = por %p83, %p84
      %p86 = scmp.ne.s32.totalorder %s72, %s73
      %p87 = scmp.eq.s32.totalorder %s23, 1
      %p88 = por %p86, %p87
      %p90 = scmp.ne.s32.totalorder %s73, %s89
      %p91 = scmp.eq.s32.totalorder %s23, 0
      %p92 = por %p90, %p91
      %s93 = ssub.s32 %s24, %s36
      %s94 = ssub.s32 %s25, %s32
      %s95 = sor.u32 %s93, %s94
      %p96 = scmp.eq.s32.totalorder %s95, 0
      %s98 = sadd.s32 %s97, 1
      %s99 = scalar_select %p96, %s97, %s98
      %p102 = pneg %p96
      %p103 = scmp.eq.s32.totalorder %s17, 1
      %p104 = por %p102, %p103
      %p105 = scmp.ne.s32.totalorder %s97, %s100
      %p106 = scmp.eq.s32.totalorder %s17, 0
      %p107 = por %p105, %p106
      %p108 = scmp.ne.s32.totalorder %s97, %s100
      %p109 = scmp.eq.s32.totalorder %s22, 1
      %p110 = por %p108, %p109
      %p111 = scmp.ne.s32.totalorder %s100, %s101
      %p112 = scmp.eq.s32.totalorder %s22, 0
      %p113 = por %p111, %p112
      %p114 = scmp.ne.s32.totalorder %s100, %s101
      %p115 = scmp.eq.s32.totalorder %s23, 1
      %p116 = por %p114, %p115
      %p118 = scmp.ne.s32.totalorder %s101, %s117
      %p119 = scmp.eq.s32.totalorder %s23, 0
      %p120 = por %p118, %p119
      %p121 = scmp.le.s32.totalorder 1, %s17
      %p122 = scmp.lt.s32.totalorder %s17, 3
      %p123 = pnand %p121, %p122
      %p124 = pneg %p123
      // Predicated region
      $region9: #{tpu_custom_call.1} parent=5 // pred_check
        _
      $region10: #{tpu_custom_call.1} parent=5 // pred_check_branch
        %126 = sbr.rel (%p123) target = $region12
      $region11: #{tpu_custom_call.1} parent=5 // pred_region
        %s127 = ssub.s32 %s17, 1
      $region12: #{tpu_custom_call.1} parent=5 // pred_fallthru
        _
      %p128 = scmp.lt.s32.totalorder %s17, 2
      // Predicated region
      $region13: #{tpu_custom_call.1} parent=5 // pred_check
        %p129 = pneg %p128
      $region14: #{tpu_custom_call.1} parent=5 // pred_check_branch
        %131 = sbr.rel (%p129) target = $region16
      $region15: #{tpu_custom_call.1} parent=5 // pred_region
        // Predicated region
        $region17: #{tpu_custom_call.1} parent=15 // pred_check
          %p132 = pneg %p51
        $region18: #{tpu_custom_call.1} parent=15 // pred_check_branch
          %134 = sbr.rel (%p132) target = $region20
        $region19: #{tpu_custom_call.1} parent=15 // pred_region
          %s135 = sand.u32 %s41, 1
          %s136 = scalar_lea.sflag [#allocation3], %s135
          %s137 = sand.u32 %s41, 1
          %s138 = smul.addr %s137, 48
          %s139 = scalar_lea.vmem [#allocation2], %s138
          %s140 = smul.u32 2, %s25
          %142 = vsyncadd %s136, 0
          %s143 = smul.addr %s24, 6
          %s144 = sadd.s32 %s140, %s143
          %s145 = smul.addr %s144, 8
          %s146 = scalar_lea.hbm %s0, %s145
          %s147 = sshll.u32 %s146, 4
          %s148 = int_to_ptr.hbm [resolvable:$true] %s147
          %s149 = sshll.u32 %s139, 4
          %s150 = int_to_ptr.vmem [resolvable:$true] %s149
          %155 = dma.hbm_to_vmem [thread:$0]  %s148, 768, %s150, %s136, 128, 128, 8
        $region20: #{tpu_custom_call.1} parent=15 // pred_fallthru
          _
        // Predicated region
        $region21: #{tpu_custom_call.1} parent=15 // pred_check
          %p156 = pneg %p79
        $region22: #{tpu_custom_call.1} parent=15 // pred_check_branch
          %158 = sbr.rel (%p156) target = $region24
        $region23: #{tpu_custom_call.1} parent=15 // pred_region
          %s159 = sand.u32 %s69, 1
          %s160 = scalar_lea.sflag [#allocation6], %s159
          %s161 = sand.u32 %s69, 1
          %s162 = smul.addr %s161, 48
          %s163 = scalar_lea.vmem [#allocation5], %s162
          %s164 = smul.u32 2, %s25
          %166 = vsyncadd %s160, 0
          %s167 = smul.addr %s24, 6
          %s168 = sadd.s32 %s164, %s167
          %s169 = smul.addr %s168, 8
          %s170 = scalar_lea.hbm %s1, %s169
          %s171 = sshll.u32 %s170, 4
          %s172 = int_to_ptr.hbm [resolvable:$true] %s171
          %s173 = sshll.u32 %s163, 4
          %s174 = int_to_ptr.vmem [resolvable:$true] %s173
          %179 = dma.hbm_to_vmem [thread:$0]  %s172, 768, %s174, %s160, 128, 128, 8
        $region24: #{tpu_custom_call.1} parent=15 // pred_fallthru
          _
      $region16: #{tpu_custom_call.1} parent=5 // pred_fallthru
        _
      %p180 = scmp.le.s32.totalorder 1, %s17
      %p181 = scmp.lt.s32.totalorder %s17, 3
      %p182 = pnand %p180, %p181
      %p183 = pneg %p182
      // Predicated region
      $region25: #{tpu_custom_call.1} parent=5 // pred_check
        _
      $region26: #{tpu_custom_call.1} parent=5 // pred_check_branch
        %185 = sbr.rel (%p182) target = $region28
      $region27: #{tpu_custom_call.1} parent=5 // pred_region
        %s186 = ssub.s32 %s17, 1
        %s187 = sand.u32 %s44, 1
        %s188 = scalar_lea.sflag [#allocation3], %s187
        %s189 = sand.u32 %s44, 1
        %s190 = smul.addr %s189, 48
        %s191 = scalar_lea.vmem [#allocation2], %s190
        // Predicated region
        $region29: #{tpu_custom_call.1} parent=27 // pred_check
          %p192 = pneg %p57
        $region30: #{tpu_custom_call.1} parent=27 // pred_check_branch
          %194 = sbr.rel (%p192) target = $region32
        $region31: #{tpu_custom_call.1} parent=27 // pred_region
          %196 = dma.done %s188, 768
        $region32: #{tpu_custom_call.1} parent=27 // pred_fallthru
          _
        %s197 = sand.u32 %s72, 1
        %s198 = scalar_lea.sflag [#allocation6], %s197
        %s199 = sand.u32 %s72, 1
        %s200 = smul.addr %s199, 48
        %s201 = scalar_lea.vmem [#allocation5], %s200
        // Predicated region
        $region33: #{tpu_custom_call.1} parent=27 // pred_check
          %p202 = pneg %p85
        $region34: #{tpu_custom_call.1} parent=27 // pred_check_branch
          %204 = sbr.rel (%p202) target = $region36
        $region35: #{tpu_custom_call.1} parent=27 // pred_region
          %206 = dma.done %s198, 768
        $region36: #{tpu_custom_call.1} parent=27 // pred_fallthru
          _
        %s207 = sand.u32 %s44, 1
        %s208 = scalar_lea.sflag [#allocation3], %s207
        %s209 = sand.u32 %s44, 1
        %s210 = smul.addr %s209, 48
        %s211 = scalar_lea.vmem [#allocation2], %s210
        %p212 = pneg %p57
        %p213 = pneg %p54
        %s214 = sand.u32 %s72, 1
        %s215 = scalar_lea.sflag [#allocation6], %s214
        %s216 = sand.u32 %s72, 1
        %s217 = smul.addr %s216, 48
        %s218 = scalar_lea.vmem [#allocation5], %s217
        %p219 = pneg %p85
        %p220 = pneg %p82
        %p221 = pneg %p113
        %p222 = pneg %p110
        %s223 = sand.u32 %s100, 1
        %s224 = scalar_lea.sflag [#allocation4], %s223
        %s225 = sand.u32 %s100, 1
        %s226 = scalar_lea.vmem [#allocation7], %s225
        %s227 = smul.u32 2, %s27
        %s228 = smul.u32 2, %s27
        %v229 = vld [vmem:[%s191] sm:$0xff]
        %v230 = vld [vmem:[%s191 + $0x8] sm:$0xff]
        %v231 = vld [vmem:[%s201] sm:$0xff]
        %v232 = vld [vmem:[%s201 + $0x8] sm:$0xff]
        %v233 = vsub.f32 %v229, %v231
        %v234 = vsub.f32 %v230, %v232
        %s235 = scalar_lea.vmem %s191, 16 [#allocation2]
        %v236 = vld [vmem:[%s235] sm:$0xff]
        %v237 = vld [vmem:[%s235 + $0x8] sm:$0xff]
        %s238 = scalar_lea.vmem %s201, 16 [#allocation5]
        %v239 = vld [vmem:[%s238] sm:$0xff]
        %v240 = vld [vmem:[%s238 + $0x8] sm:$0xff]
        %v241 = vsub.f32 %v236, %v239
        %v242 = vsub.f32 %v237, %v240
        %s243 = scalar_lea.vmem %s191, 32 [#allocation2]
        %v244 = vld [vmem:[%s243] sm:$0xff]
        %v245 = vld [vmem:[%s243 + $0x8] sm:$0xff]
        %s246 = scalar_lea.vmem %s201, 32 [#allocation5]
        %v247 = vld [vmem:[%s246] sm:$0xff]
        %v248 = vld [vmem:[%s246 + $0x8] sm:$0xff]
        %v249 = vsub.f32 %v244, %v247
        %v250 = vsub.f32 %v245, %v248
        %v251 = vmul.f32 %v233, 0.299
        %v252 = vmul.f32 %v234, 0.299
        %v253 = vmul.f32 %v241, 0.587
        %v254 = vmul.f32 %v242, 0.587
        %v255 = vadd.f32 %v251, %v253
        %v256 = vadd.f32 %v252, %v254
        %v257 = vmul.f32 %v249, 0.114
        %v258 = vmul.f32 %v250, 0.114
        %v259 = vadd.f32 %v255, %v257
        %v260 = vadd.f32 %v256, %v258
        %v261 = vsub.f32 %v249, %v259
        %v262 = vsub.f32 %v250, %v260
        %v263 = vand.u32 2147483647, %v261
        %v264 = vand.u32 2147483647, %v262
        %v265 = vmul.f32 %v263, 0.564
        %v266 = vmul.f32 %v264, 0.564
        %v267 = vsub.f32 %v233, %v259
        %v268 = vsub.f32 %v234, %v260
        %v269 = vand.u32 2147483647, %v267
        %v270 = vand.u32 2147483647, %v268
        %v271 = vmul.f32 %v269, 0.713
        %v272 = vmul.f32 %v270, 0.713
        %v273 = vadd.f32 %v265, %v271
        %v274 = vadd.f32 %v266, %v272
        %vm275 = vcmask 130048
        %v276 = vsel %vm275, %v273, 0.0
        %v277 = vsel %vm275, %v274, 0.0
        %v278 = vadd.f32 %v276, %v277
        %v279 = vrot.slane %v278, 4
        %v280 = vadd.f32 %v278, %v279
        %v281 = vrot.slane %v280, 2
        %v282 = vadd.f32 %v280, %v281
        %v283 = vrot.slane %v282, 1
        %v284 = vadd.f32 %v282, %v283
        %vm285 = vcmask 122880
        %286 = vst.msk [vmem:[%s226] sm:$0x1] %vm285, %v284
        %s287 = sand.u32 %s100, 1
        %s288 = scalar_lea.sflag [#allocation4], %s287
        %s289 = sand.u32 %s100, 1
        %s290 = scalar_lea.vmem [#allocation7], %s289
        // Predicated region
        $region37: #{tpu_custom_call.1} parent=27 // pred_check
          %p291 = pneg %p110
        $region38: #{tpu_custom_call.1} parent=27 // pred_check_branch
          %293 = sbr.rel (%p291) target = $region40
        $region39: #{tpu_custom_call.1} parent=27 // pred_region
          %295 = vsyncadd %s288, 0
          %s296 = sadd.s32 %s27, %s26
          %s297 = scalar_lea.hbm %s2, %s296
          %s299 = sshll.u32 %s290, 4
          %s300 = int_to_ptr.vmem [resolvable:$true] %s299
          %s301 = sshll.u32 %s297, 4
          %s302 = int_to_ptr.hbm [resolvable:$true] %s301
          %304 = dma.vmem_to_hbm [thread:$0]  %s300, 16, %s302, %s288
        $region40: #{tpu_custom_call.1} parent=27 // pred_fallthru
          _
      $region28: #{tpu_custom_call.1} parent=5 // pred_fallthru
        _
      %p305 = scmp.le.s32.totalorder 2, %s17
      // Predicated region
      $region41: #{tpu_custom_call.1} parent=5 // pred_check
        %p306 = pneg %p305
      $region42: #{tpu_custom_call.1} parent=5 // pred_check_branch
        %308 = sbr.rel (%p306) target = $region44
      $region43: #{tpu_custom_call.1} parent=5 // pred_region
        %s309 = ssub.s32 %s17, 2
        // Predicated region
        $region45: #{tpu_custom_call.1} parent=43 // pred_check
          %p310 = pneg %p116
        $region46: #{tpu_custom_call.1} parent=43 // pred_check_branch
          %312 = sbr.rel (%p310) target = $region48
        $region47: #{tpu_custom_call.1} parent=43 // pred_region
          %s313 = sand.u32 %s101, 1
          %s314 = scalar_lea.sflag [#allocation4], %s313
          %s315 = sand.u32 %s101, 1
          %s316 = scalar_lea.vmem [#allocation7], %s315
          %318 = dma.done %s314, 16
        $region48: #{tpu_custom_call.1} parent=43 // pred_fallthru
          _
      $region44: #{tpu_custom_call.1} parent=5 // pred_fallthru
        _
    $region6: #{tpu_custom_call.1} parent=1 // loop_footer
      %s21 = sadd.s32 1, %s17
    $region7: #{tpu_custom_call.1} parent=1 // loop_footer_branch
      %16 = sbr.rel target = $region3
    $region8: #{tpu_custom_call.1} parent=1 // loop_exit
      _
    %319 = vsyncpa [#allocation3], 1
    %s320 = scalar_lea.sflag [#allocation3], 1
    %321 = vsyncpa %s320, 1
    %322 = vsyncpa [#allocation6], 1
    %s323 = scalar_lea.sflag [#allocation6], 1
    %324 = vsyncpa %s323, 1
    %325 = vsyncpa [#allocation4], 1
    %s326 = scalar_lea.sflag [#allocation4], 1
    %327 = vsyncpa %s326, 1

</llo_original>
